<compile_context>
chip_gen: v7x
topology: tpu7x:2x2x1
jax: 0.10.0
libtpu: 0.0.40
codegen_flags: <defaults>
</compile_context>

<pallas_src>
import jax
import jax.numpy as jnp
from jax.experimental import pallas as pl
from jax.experimental.pallas import tpu as pltpu


def gcn2_kernel(x_ref, a_ref, w1_ref, b1_ref, w2_ref, b2_ref, o_ref):
    x = x_ref[...]                    # (M_pad, F)   flattened batch*node rows
    a = a_ref[...]                    # (M_pad, M_pad) block-diagonal A_hat

    # Layer 1: ReLU(A_hat @ X @ W1 + b1)
    xw1 = jnp.dot(x, w1_ref[...], preferred_element_type=jnp.float32)       # (M, H)
    h1 = jnp.dot(a, xw1, preferred_element_type=jnp.float32) + b1_ref[...]   # (M, H)
    h1 = jnp.maximum(h1, 0.0)

    # Layer 2: A_hat @ H1 @ W2 + b2  (W2/b2 zero-padded to 128 output lanes)
    hw2 = jnp.dot(h1, w2_ref[...], preferred_element_type=jnp.float32)       # (M, 128)
    out = jnp.dot(a, hw2, preferred_element_type=jnp.float32) + b2_ref[...]  # (M, 128)

    o_ref[...] = out.astype(o_ref.dtype)


def gcn_forward(x, a_hat, w1, b1, w2, b2):
    B, N, F = x.shape
    H = w1.shape[1]
    O = w2.shape[1]

    M = B * N
    M_pad = ((M + 7) // 8) * 8        # sublane-align the row dim
    O_pad = 128                       # lane-dense output stores

    # Collapse batch into rows; shared adjacency becomes block-diagonal.
    x_flat = x.reshape(M, F).astype(jnp.float32)
    x_flat = jnp.pad(x_flat, ((0, M_pad - M), (0, 0)))
    a_bd = jnp.kron(jnp.eye(B, dtype=jnp.float32), a_hat)
    a_bd = jnp.pad(a_bd, ((0, M_pad - M), (0, M_pad - M)))

    # Zero-pad layer-2 weights/bias to 128 output lanes.
    w2_p = jnp.pad(w2, ((0, 0), (0, O_pad - O)))
    b2_p = jnp.pad(b2, ((0, 0), (0, O_pad - O)))

    out_pad = pl.pallas_call(
        gcn2_kernel,
        out_shape=jax.ShapeDtypeStruct((M_pad, O_pad), jnp.float32),
        grid_spec=pl.GridSpec(
            grid=(1,),
            in_specs=[
                pl.BlockSpec((M_pad, F), lambda i: (0, 0)),       # X (flattened)
                pl.BlockSpec((M_pad, M_pad), lambda i: (0, 0)),   # block-diag A_hat
                pl.BlockSpec((F, H), lambda i: (0, 0)),           # W1
                pl.BlockSpec((1, H), lambda i: (0, 0)),           # b1
                pl.BlockSpec((H, O_pad), lambda i: (0, 0)),       # W2 (padded)
                pl.BlockSpec((1, O_pad), lambda i: (0, 0)),       # b2 (padded)
            ],
            out_specs=pl.BlockSpec((M_pad, O_pad), lambda i: (0, 0)),
        ),
        compiler_params=pltpu.CompilerParams(
            dimension_semantics=("arbitrary",)),
    )(x_flat, a_bd, w1, b1, w2_p, b2_p)

    return out_pad[:M, :O].reshape(B, N, O)


def normalized_adjacency(edge_index, num_nodes):
    """D^{-1/2} (A + I) D^{-1/2} from a (2, E) edge_index."""
    src, dst = edge_index[0], edge_index[1]
    a = jnp.zeros((num_nodes, num_nodes), jnp.float32)
    a = a.at[src, dst].set(1.0)
    a = jnp.maximum(a, a.T)                              # symmetrize
    a = a + jnp.eye(num_nodes, dtype=jnp.float32)        # self loops
    deg = a.sum(axis=1)
    dinv = jnp.where(deg > 0, 1.0 / jnp.sqrt(deg), 0.0)
    return dinv[:, None] * a * dinv[None, :]


def init_params(key, in_feats=25, hidden=100, out=2):
    k1, k2 = jax.random.split(key)
    # Glorot-uniform style deterministic init.
    lim1 = (6.0 / (in_feats + hidden)) ** 0.5
    lim2 = (6.0 / (hidden + out)) ** 0.5
    w1 = jax.random.uniform(k1, (in_feats, hidden), jnp.float32, -lim1, lim1)
    b1 = jnp.zeros((1, hidden), jnp.float32)
    w2 = jax.random.uniform(k2, (hidden, out), jnp.float32, -lim2, lim2)
    b2 = jnp.zeros((1, out), jnp.float32)
    return w1, b1, w2, b2


def gnn_forward(input_list, ts_list, edge_index, params):
    # torch: outputs = cat([x[:, -3, :].reshape(B, 1, 25) for x in input_list], dim=1)
    outputs = jnp.concatenate(
        [x[:, -3, :].reshape(x.shape[0], 1, 25) for x in input_list], axis=1)
    num_nodes = outputs.shape[1]
    a_hat = normalized_adjacency(edge_index, num_nodes)
    return gcn_forward(outputs.astype(jnp.float32), a_hat, *params)


if __name__ == "__main__":
    key = jax.random.PRNGKey(0)
    k_params, k_data = jax.random.split(key)

    B = 2          # batch
    T = 8          # time steps per series (must be >= 3 for x[:, -3, :])
    F = 25         # per-node feature dim
    NUM_NODES = 6  # len(input_list) -> number of graph nodes

    # Build input_list: NUM_NODES tensors of shape (B, T, F)
    data_keys = jax.random.split(k_data, NUM_NODES)
    input_list = [jax.random.normal(dk, (B, T, F), jnp.float32) for dk in data_keys]
    ts_list = [jnp.arange(T, dtype=jnp.float32) for _ in range(NUM_NODES)]  # unused in forward

    # Simple ring graph edge_index, shape (2, E)
    src = jnp.arange(NUM_NODES, dtype=jnp.int32)
    dst = (src + 1) % NUM_NODES
    edge_index = jnp.stack([src, dst], axis=0)

    params = init_params(k_params, in_feats=F, hidden=100, out=2)

    out = gnn_forward(input_list, ts_list, edge_index, params)
    out = jax.block_until_ready(out)
    assert out.shape == (B, NUM_NODES, 2), out.shape
    print("KERNEL_OK")
</pallas_src>

<mosaic_0001>
module attributes {stable_mosaic.version = 11 : i64} {
  func.func @gcn2_kernel(%arg0: i32, %arg1: memref<16x25xf32, #tpu.memory_space<vmem>>, %arg2: memref<16x16xf32, #tpu.memory_space<vmem>>, %arg3: memref<25x100xf32, #tpu.memory_space<vmem>>, %arg4: memref<1x100xf32, #tpu.memory_space<vmem>>, %arg5: memref<100x128xf32, #tpu.memory_space<vmem>>, %arg6: memref<1x128xf32, #tpu.memory_space<vmem>>, %arg7: memref<16x128xf32, #tpu.memory_space<vmem>>) attributes {dimension_semantics = [#tpu.dimension_semantics<arbitrary>], iteration_bounds = array<i64: 1>, scalar_prefetch = 0 : i64, scratch_operands = 0 : i64, tpu.core_type = #tpu.core_type<tc>, window_params = [{pipeline_mode = #tpu.pipeline_mode<synchronous>, transform_indices = @transform_0, window_bounds = array<i64: 16, 25>}, {pipeline_mode = #tpu.pipeline_mode<synchronous>, transform_indices = @transform_1, window_bounds = array<i64: 16, 16>}, {pipeline_mode = #tpu.pipeline_mode<synchronous>, transform_indices = @transform_2, window_bounds = array<i64: 25, 100>}, {pipeline_mode = #tpu.pipeline_mode<synchronous>, transform_indices = @transform_3, window_bounds = array<i64: 1, 100>}, {pipeline_mode = #tpu.pipeline_mode<synchronous>, transform_indices = @transform_4, window_bounds = array<i64: 100, 128>}, {pipeline_mode = #tpu.pipeline_mode<synchronous>, transform_indices = @transform_5, window_bounds = array<i64: 1, 128>}, {pipeline_mode = #tpu.pipeline_mode<synchronous>, transform_indices = @transform_6, window_bounds = array<i64: 16, 128>}]} {
    %c0 = arith.constant 0 : index
    %c0_0 = arith.constant 0 : index
    %0 = vector.load %arg1[%c0, %c0_0] : memref<16x25xf32, #tpu.memory_space<vmem>>, vector<16x25xf32>
    %c0_1 = arith.constant 0 : index
    %c0_2 = arith.constant 0 : index
    %1 = vector.load %arg2[%c0_1, %c0_2] : memref<16x16xf32, #tpu.memory_space<vmem>>, vector<16x16xf32>
    %c0_3 = arith.constant 0 : index
    %c0_4 = arith.constant 0 : index
    %2 = vector.load %arg3[%c0_3, %c0_4] : memref<25x100xf32, #tpu.memory_space<vmem>>, vector<25x100xf32>
    %cst = arith.constant dense<0.000000e+00> : vector<16x100xf32>
    %3 = tpu.matmul %0, %2, %cst {dimension_numbers = #tpu.dot_dimension_numbers<[1], [0], [0], [1], [0, 0, 1, 1], [], []>} : vector<16x25xf32>, vector<25x100xf32>, vector<16x100xf32> -> vector<16x100xf32>
    %cst_5 = arith.constant dense<0.000000e+00> : vector<16x100xf32>
    %4 = tpu.matmul %1, %3, %cst_5 {dimension_numbers = #tpu.dot_dimension_numbers<[1], [0], [0], [1], [0, 0, 1, 1], [], []>} : vector<16x16xf32>, vector<16x100xf32>, vector<16x100xf32> -> vector<16x100xf32>
    %c0_6 = arith.constant 0 : index
    %c0_7 = arith.constant 0 : index
    %5 = vector.load %arg4[%c0_6, %c0_7] : memref<1x100xf32, #tpu.memory_space<vmem>>, vector<1x100xf32>
    %6 = vector.broadcast %5 : vector<1x100xf32> to vector<16x100xf32>
    %7 = arith.addf %4, %6 : vector<16x100xf32>
    %cst_8 = arith.constant 0.000000e+00 : f32
    %8 = vector.broadcast %cst_8 : f32 to vector<16x100xf32>
    %9 = arith.maximumf %7, %8 : vector<16x100xf32>
    %c0_9 = arith.constant 0 : index
    %c0_10 = arith.constant 0 : index
    %10 = vector.load %arg5[%c0_9, %c0_10] : memref<100x128xf32, #tpu.memory_space<vmem>>, vector<100x128xf32>
    %cst_11 = arith.constant dense<0.000000e+00> : vector<16x128xf32>
    %11 = tpu.matmul %9, %10, %cst_11 {dimension_numbers = #tpu.dot_dimension_numbers<[1], [0], [0], [1], [0, 0, 1, 1], [], []>} : vector<16x100xf32>, vector<100x128xf32>, vector<16x128xf32> -> vector<16x128xf32>
    %cst_12 = arith.constant dense<0.000000e+00> : vector<16x128xf32>
    %12 = tpu.matmul %1, %11, %cst_12 {dimension_numbers = #tpu.dot_dimension_numbers<[1], [0], [0], [1], [0, 0, 1, 1], [], []>} : vector<16x16xf32>, vector<16x128xf32>, vector<16x128xf32> -> vector<16x128xf32>
    %c0_13 = arith.constant 0 : index
    %c0_14 = arith.constant 0 : index
    %13 = vector.load %arg6[%c0_13, %c0_14] : memref<1x128xf32, #tpu.memory_space<vmem>>, vector<1x128xf32>
    %14 = vector.broadcast %13 : vector<1x128xf32> to vector<16x128xf32>
    %15 = arith.addf %12, %14 : vector<16x128xf32>
    %c0_15 = arith.constant 0 : index
    %c0_16 = arith.constant 0 : index
    %16 = vector.load %arg7[%c0_15, %c0_16] : memref<16x128xf32, #tpu.memory_space<vmem>>, vector<16x128xf32>
    tpu.vector_store %arg7[%c0_15, %c0_16], %15 {strides = array<i32>} : memref<16x128xf32, #tpu.memory_space<vmem>>, vector<16x128xf32>,
    return
  }
  func.func @transform_0(%arg0: i32) -> (i32, i32) {
    %c0_i32 = arith.constant 0 : i32
    %c0_i32_0 = arith.constant 0 : i32
    %c0_i32_1 = arith.constant 0 : i32
    return %c0_i32, %c0_i32_0 : i32, i32
  }
  func.func @transform_1(%arg0: i32) -> (i32, i32) {
    %c0_i32 = arith.constant 0 : i32
    %c0_i32_0 = arith.constant 0 : i32
    %c0_i32_1 = arith.constant 0 : i32
    return %c0_i32, %c0_i32_0 : i32, i32
  }
  func.func @transform_2(%arg0: i32) -> (i32, i32) {
    %c0_i32 = arith.constant 0 : i32
    %c0_i32_0 = arith.constant 0 : i32
    %c0_i32_1 = arith.constant 0 : i32
    return %c0_i32, %c0_i32_0 : i32, i32
  }
  func.func @transform_3(%arg0: i32) -> (i32, i32) {
    %c0_i32 = arith.constant 0 : i32
    %c0_i32_0 = arith.constant 0 : i32
    %c0_i32_1 = arith.constant 0 : i32
    return %c0_i32, %c0_i32_0 : i32, i32
  }
  func.func @transform_4(%arg0: i32) -> (i32, i32) {
    %c0_i32 = arith.constant 0 : i32
    %c0_i32_0 = arith.constant 0 : i32
    %c0_i32_1 = arith.constant 0 : i32
    return %c0_i32, %c0_i32_0 : i32, i32
  }
  func.func @transform_5(%arg0: i32) -> (i32, i32) {
    %c0_i32 = arith.constant 0 : i32
    %c0_i32_0 = arith.constant 0 : i32
    %c0_i32_1 = arith.constant 0 : i32
    return %c0_i32, %c0_i32_0 : i32, i32
  }
  func.func @transform_6(%arg0: i32) -> (i32, i32) {
    %c0_i32 = arith.constant 0 : i32
    %c0_i32_0 = arith.constant 0 : i32
    %c0_i32_1 = arith.constant 0 : i32
    return %c0_i32, %c0_i32_0 : i32, i32
  }
}

</mosaic_0001>

<llo_original>
// kernel: tpu_custom_call.1
$region0: #{tpu_custom_call.1}
  #allocation0 [shape = 'u32[]', space=smem, size = 0x4, offset = 0x4, fixed_abs, tag = 'smem constant byte address 0x4 - core index']
  #allocation1 [shape = 'u32[144,128]{1,0:T(1,128)}', space=vmem, size = 0x12000, scoped, tag = 'internal scratch']
  %s0 = inlined_call_operand.hbm [shape: f32[16,25], index: 0, kind: input, shape index: {}]
  %s1 = inlined_call_operand.hbm [shape: f32[16,16], index: 1, kind: input, shape index: {}]
  %s2 = inlined_call_operand.hbm [shape: f32[25,100], index: 2, kind: input, shape index: {}]
  %s3 = inlined_call_operand.vmem [shape: f32[1,100], index: 3, kind: input, shape index: {}]
  %s4 = inlined_call_operand.hbm [shape: f32[100,128], index: 4, kind: input, shape index: {}]
  %s5 = inlined_call_operand.vmem [shape: f32[1,128], index: 5, kind: input, shape index: {}]
  %s6 = inlined_call_operand.hbm [shape: f32[16,128], index: 6, kind: output, shape index: {}]
  %s7 = sld [smem:[#allocation0]]
  $region50: #{tpu_custom_call.1} parent=0
    _
  %s9 = ssub.s32 1, %s7
  %s10 = scalar_select 0, %s9, %s7
  $region1: #{tpu_custom_call.1} parent=0
    #allocation2 [shape = 'u8[8192]{0}', space=vmem, size = 0x2000, scoped, tag = 'input window, operand 0, single buffered']
    #allocation3 [shape = 's32[1]{0}', space=sflag, size = 0x4, scoped, tag = 'scoped memory for tpu_custom_call.1']
    #allocation4 [shape = 's32[1]{0}', space=sflag, size = 0x4, scoped, tag = 'scoped memory for tpu_custom_call.1']
    #allocation5 [shape = 'u8[8192]{0}', space=vmem, size = 0x2000, scoped, tag = 'input window, operand 1, single buffered']
    #allocation6 [shape = 's32[1]{0}', space=sflag, size = 0x4, scoped, tag = 'scoped memory for tpu_custom_call.1']
    #allocation7 [shape = 'u8[16384]{0}', space=vmem, size = 0x4000, scoped, tag = 'input window, operand 2, single buffered']
    #allocation8 [shape = 'u8[53248]{0}', space=vmem, size = 0xd000, scoped, tag = 'input window, operand 4, single buffered']
    #allocation9 [shape = 's32[1]{0}', space=sflag, size = 0x4, scoped, tag = 'scoped memory for tpu_custom_call.1']
    #allocation10 [shape = 'u8[8192]{0}', space=vmem, size = 0x2000, scoped, tag = 'output window, operand 0, single buffered']
    %11 = vsyncpa [#allocation3], 0
    %12 = vsyncpa [#allocation6], 0
    %13 = vsyncpa [#allocation9], 0
    %14 = vsyncpa [#allocation4], 0
    // Predicated region
    $region2: #{tpu_custom_call.1} parent=1 // pred_check
      _
    $region3: #{tpu_custom_call.1} parent=1 // pred_check_branch
      %16 = sbr.rel (0) target = $region5
    $region4: #{tpu_custom_call.1} parent=1 // pred_region
      %s18 = ssub.s32 256, 256
      %19 = vsyncadd [#allocation3], %s18
      %s20 = sshll.u32 [#allocation2], 4
      %s21 = int_to_ptr.vmem [resolvable:$true] %s20
      %26 = dma.hbm_to_vmem [thread:$0]  %s0, 256, %s21, [#allocation3], 128, 128, 8
    $region5: #{tpu_custom_call.1} parent=1 // pred_fallthru
      _
    // Predicated region
    $region6: #{tpu_custom_call.1} parent=1 // pred_check
      _
    $region7: #{tpu_custom_call.1} parent=1 // pred_check_branch
      %28 = sbr.rel (0) target = $region9
    $region8: #{tpu_custom_call.1} parent=1 // pred_region
      %s30 = ssub.s32 256, 256
      %31 = vsyncadd [#allocation6], %s30
      %s32 = sshll.u32 [#allocation5], 4
      %s33 = int_to_ptr.vmem [resolvable:$true] %s32
      %38 = dma.hbm_to_vmem [thread:$0]  %s1, 256, %s33, [#allocation6], 128, 128, 8
    $region9: #{tpu_custom_call.1} parent=1 // pred_fallthru
      _
    // Predicated region
    $region10: #{tpu_custom_call.1} parent=1 // pred_check
      _
    $region11: #{tpu_custom_call.1} parent=1 // pred_check_branch
      %40 = sbr.rel (0) target = $region13
    $region12: #{tpu_custom_call.1} parent=1 // pred_region
      %s42 = ssub.s32 512, 512
      %43 = vsyncadd [#allocation6], %s42
      %s44 = sshll.u32 [#allocation7], 4
      %s45 = int_to_ptr.vmem [resolvable:$true] %s44
      %50 = dma.hbm_to_vmem [thread:$0]  %s2, 512, %s45, [#allocation6], 128, 128, 8
    $region13: #{tpu_custom_call.1} parent=1 // pred_fallthru
      _
    // Predicated region
    $region14: #{tpu_custom_call.1} parent=1 // pred_check
      _
    $region15: #{tpu_custom_call.1} parent=1 // pred_check_branch
      %52 = sbr.rel (0) target = $region17
    $region16: #{tpu_custom_call.1} parent=1 // pred_region
      _
    $region17: #{tpu_custom_call.1} parent=1 // pred_fallthru
      _
    // Predicated region
    $region18: #{tpu_custom_call.1} parent=1 // pred_check
      _
    $region19: #{tpu_custom_call.1} parent=1 // pred_check_branch
      %54 = sbr.rel (0) target = $region21
    $region20: #{tpu_custom_call.1} parent=1 // pred_region
      %s56 = ssub.s32 1664, 1664
      %57 = vsyncadd [#allocation9], %s56
      %s58 = sshll.u32 [#allocation8], 4
      %s59 = int_to_ptr.vmem [resolvable:$true] %s58
      %64 = dma.hbm_to_vmem [thread:$0]  %s4, 1664, %s59, [#allocation9], 128, 128, 8
    $region21: #{tpu_custom_call.1} parent=1 // pred_fallthru
      _
    // Predicated region
    $region22: #{tpu_custom_call.1} parent=1 // pred_check
      _
    $region23: #{tpu_custom_call.1} parent=1 // pred_check_branch
      %66 = sbr.rel (0) target = $region25
    $region24: #{tpu_custom_call.1} parent=1 // pred_region
      _
    $region25: #{tpu_custom_call.1} parent=1 // pred_fallthru
      _
    // Predicated region
    $region26: #{tpu_custom_call.1} parent=1 // pred_check
      _
    $region27: #{tpu_custom_call.1} parent=1 // pred_check_branch
      %68 = sbr.rel (0) target = $region29
    $region28: #{tpu_custom_call.1} parent=1 // pred_region
      %69 = dma.done [#allocation3], 256
    $region29: #{tpu_custom_call.1} parent=1 // pred_fallthru
      _
    // Predicated region
    $region30: #{tpu_custom_call.1} parent=1 // pred_check
      _
    $region31: #{tpu_custom_call.1} parent=1 // pred_check_branch
      %71 = sbr.rel (0) target = $region33
    $region32: #{tpu_custom_call.1} parent=1 // pred_region
      %72 = dma.done [#allocation6], 256
    $region33: #{tpu_custom_call.1} parent=1 // pred_fallthru
      _
    // Predicated region
    $region34: #{tpu_custom_call.1} parent=1 // pred_check
      _
    $region35: #{tpu_custom_call.1} parent=1 // pred_check_branch
      %74 = sbr.rel (0) target = $region37
    $region36: #{tpu_custom_call.1} parent=1 // pred_region
      %75 = dma.done [#allocation6], 512
    $region37: #{tpu_custom_call.1} parent=1 // pred_fallthru
      _
    // Predicated region
    $region38: #{tpu_custom_call.1} parent=1 // pred_check
      _
    $region39: #{tpu_custom_call.1} parent=1 // pred_check_branch
      %77 = sbr.rel (0) target = $region41
    $region40: #{tpu_custom_call.1} parent=1 // pred_region
      %78 = dma.done [#allocation9], 1664
    $region41: #{tpu_custom_call.1} parent=1 // pred_fallthru
      _
    %v79 = vld [vmem:[#allocation2] sm:$0xff]
    %v80 = vld [vmem:[#allocation2 + $0x8] sm:$0xff]
    %v81 = vld [vmem:[#allocation5] sm:$0xff]
    %v82 = vld [vmem:[#allocation5 + $0x8] sm:$0xff]
    %v83 = vld [vmem:[#allocation7] sm:$0xff]
    %v84 = vld [vmem:[#allocation7 + $0x8] sm:$0xff]
    %v85 = vld [vmem:[#allocation7 + $0x10] sm:$0xff]
    %v86 = vld [vmem:[#allocation7 + $0x18] sm:$0x1]
    %vm87 = vcmask 203776
    %v89 = vsel %vm87, %v79, 0
    %v92 = vsel %vm87, %v80, 0
    %vm94 = vcmask 1040384
    %v96 = vsel %vm94, %v86, 0
    %98 = vmatprep.subr.mxu0 0.0
    %99 = vmatpush1.msra.mxu0 %v83
    %100 = vmatprep.subr.mxu0 0.0
    %101 = vmatpush1.msra.mxu0 %v84
    %102 = vmatprep.subr.mxu0 0.0
    %103 = vmatpush1.msra.mxu0 %v85
    %104 = vmatprep.subr.mxu0 0.0
    %105 = vmatpush1.msra.mxu0 %v96
    %106 = vmatprep.subr.mxu0 0.0
    %107 = vmatpush1.msra.mxu0 0.0
    %108 = vmatprep.subr.mxu0 0.0
    %109 = vmatpush1.msra.mxu0 0.0
    %110 = vmatprep.subr.mxu0 0.0
    %111 = vmatpush1.msra.mxu0 0.0
    %112 = vmatprep.subr.mxu0 0.0
    %113 = vmatpush1.msra.mxu0 0.0
    %114 = vmatprep.subr.mxu0 0.0
    %115 = vmatpush1.msra.mxu0 0.0
    %116 = vmatprep.subr.mxu0 0.0
    %117 = vmatpush1.msra.mxu0 0.0
    %118 = vmatprep.subr.mxu0 0.0
    %119 = vmatpush1.msra.mxu0 0.0
    %120 = vmatprep.subr.mxu0 0.0
    %121 = vmatpush1.msra.mxu0 0.0
    %122 = vmatprep.subr.mxu0 0.0
    %123 = vmatpush1.msra.mxu0 0.0
    %124 = vmatprep.subr.mxu0 0.0
    %125 = vmatpush1.msra.mxu0 0.0
    %126 = vmatprep.subr.mxu0 0.0
    %127 = vmatpush1.msra.mxu0 0.0
    %128 = vmatprep.subr.mxu0 0.0
    %129 = vmatpush1.msra.mxu0 0.0
    %130 = vmatprep.subr.mxu0 0.0
    %131 = vmatpush1.msra.mxu0 0.0
    %132 = vmatprep.subr.mxu0 0.0
    %133 = vmatpush1.msra.mxu0 0.0
    %134 = vmatprep.subr.mxu0 0.0
    %135 = vmatpush1.msra.mxu0 0.0
    %136 = vmatprep.subr.mxu0 0.0
    %137 = vmatpush1.msra.mxu0 0.0
    %138 = vmatprep.subr.mxu0 0.0
    %139 = vmatpush1.msra.mxu0 0.0
    %140 = vmatprep.subr.mxu0 0.0
    %141 = vmatpush1.msra.mxu0 0.0
    %142 = vmatprep.subr.mxu0 0.0
    %143 = vmatpush1.msra.mxu0 0.0
    %144 = vmatprep.subr.mxu0 0.0
    %145 = vmatpush1.msra.mxu0 0.0
    %146 = vmatprep.subr.mxu0 0.0
    %147 = vmatpush1.msra.mxu0 0.0
    %148 = vmatprep.subr.mxu0 0.0
    %149 = vmatpush1.msra.mxu0 0.0
    %150 = vmatprep.subr.mxu0 0.0
    %151 = vmatpush1.msra.mxu0 0.0
    %152 = vmatprep.subr.mxu0 0.0
    %153 = vmatpush1.msra.mxu0 0.0
    %154 = vmatprep.subr.mxu0 0.0
    %155 = vmatpush1.msra.mxu0 0.0
    %156 = vmatprep.subr.mxu0 0.0
    %157 = vmatpush1.msra.mxu0 0.0
    %158 = vmatprep.subr.mxu0 0.0
    %159 = vmatpush1.msra.mxu0 0.0
    %160 = vmatprep.subr.mxu0 0.0
    %161 = vmatpush1.msra.mxu0 0.0
    %162 = vmatprep.mubr.f32.mxu0 0.0
    %163 = vmatmul.mubr.f32.gmra.mrb[0].mxu0 %v89
    %v164 = vpop.f32.mrb[0].mxu0
    %v165 = vadd.f32 0.0, %v164
    %v166 = vpop.f32.mrb[0].mxu0
    %167 = vmatprep.mubr.f32.mxu0 0.0
    %168 = vmatmul.mubr.f32.gmra.mrb[0].mxu0 %v92
    %v169 = vpop.f32.mrb[0].mxu0
    %v170 = vadd.f32 0.0, %v169
    %v171 = vpop.f32.mrb[0].mxu0
    %172 = vdwg.mxu0
    %v173 = vld [vmem:[%s3] sm:$0x1]
    %v175 = vlaneseq
    %v176 = vshrl.u32 %v175, 7
    %v177 = vsub.s32 0, %v176
    %v178 = vrot.slane %v173, %v177
    %vm180 = vcmask 130048
    %v182 = vsel %vm180, %v81, 0
    %v185 = vsel %vm180, %v82, 0
    %187 = vmatprep.subr.mxu0 0.0
    %188 = vmatpush1.msra.mxu0 %v165
    %189 = vmatprep.subr.mxu0 0.0
    %190 = vmatpush1.msra.mxu0 %v170
    %191 = vmatprep.subr.mxu0 0.0
    %192 = vmatpush1.msra.mxu0 0.0
    %193 = vmatprep.subr.mxu0 0.0
    %194 = vmatpush1.msra.mxu0 0.0
    %195 = vmatprep.subr.mxu0 0.0
    %196 = vmatpush1.msra.mxu0 0.0
    %197 = vmatprep.subr.mxu0 0.0
    %198 = vmatpush1.msra.mxu0 0.0
    %199 = vmatprep.subr.mxu0 0.0
    %200 = vmatpush1.msra.mxu0 0.0
    %201 = vmatprep.subr.mxu0 0.0
    %202 = vmatpush1.msra.mxu0 0.0
    %203 = vmatprep.subr.mxu0 0.0
    %204 = vmatpush1.msra.mxu0 0.0
    %205 = vmatprep.subr.mxu0 0.0
    %206 = vmatpush1.msra.mxu0 0.0
    %207 = vmatprep.subr.mxu0 0.0
    %208 = vmatpush1.msra.mxu0 0.0
    %209 = vmatprep.subr.mxu0 0.0
    %210 = vmatpush1.msra.mxu0 0.0
    %211 = vmatprep.subr.mxu0 0.0
    %212 = vmatpush1.msra.mxu0 0.0
    %213 = vmatprep.subr.mxu0 0.0
    %214 = vmatpush1.msra.mxu0 0.0
    %215 = vmatprep.subr.mxu0 0.0
    %216 = vmatpush1.msra.mxu0 0.0
    %217 = vmatprep.subr.mxu0 0.0
    %218 = vmatpush1.msra.mxu0 0.0
    %219 = vmatprep.subr.mxu0 0.0
    %220 = vmatpush1.msra.mxu0 0.0
    %221 = vmatprep.subr.mxu0 0.0
    %222 = vmatpush1.msra.mxu0 0.0
    %223 = vmatprep.subr.mxu0 0.0
    %224 = vmatpush1.msra.mxu0 0.0
    %225 = vmatprep.subr.mxu0 0.0
    %226 = vmatpush1.msra.mxu0 0.0
    %227 = vmatprep.subr.mxu0 0.0
    %228 = vmatpush1.msra.mxu0 0.0
    %229 = vmatprep.subr.mxu0 0.0
    %230 = vmatpush1.msra.mxu0 0.0
    %231 = vmatprep.subr.mxu0 0.0
    %232 = vmatpush1.msra.mxu0 0.0
    %233 = vmatprep.subr.mxu0 0.0
    %234 = vmatpush1.msra.mxu0 0.0
    %235 = vmatprep.subr.mxu0 0.0
    %236 = vmatpush1.msra.mxu0 0.0
    %237 = vmatprep.subr.mxu0 0.0
    %238 = vmatpush1.msra.mxu0 0.0
    %239 = vmatprep.subr.mxu0 0.0
    %240 = vmatpush1.msra.mxu0 0.0
    %241 = vmatprep.subr.mxu0 0.0
    %242 = vmatpush1.msra.mxu0 0.0
    %243 = vmatprep.subr.mxu0 0.0
    %244 = vmatpush1.msra.mxu0 0.0
    %245 = vmatprep.subr.mxu0 0.0
    %246 = vmatpush1.msra.mxu0 0.0
    %247 = vmatprep.subr.mxu0 0.0
    %248 = vmatpush1.msra.mxu0 0.0
    %249 = vmatprep.subr.mxu0 0.0
    %250 = vmatpush1.msra.mxu0 0.0
    %251 = vmatprep.mubr.f32.mxu0 0.0
    %252 = vmatmul.mubr.f32.gmra.mrb[0].mxu0 %v182
    %v253 = vpop.f32.mrb[0].mxu0
    %v254 = vadd.f32 %v178, %v253
    %v255 = vpop.f32.mrb[0].mxu0
    %256 = vmatprep.mubr.f32.mxu0 0.0
    %257 = vmatmul.mubr.f32.gmra.mrb[0].mxu0 %v185
    %v258 = vpop.f32.mrb[0].mxu0
    %v259 = vadd.f32 %v178, %v258
    %v260 = vpop.f32.mrb[0].mxu0
    %261 = vdwg.mxu0
    %v262 = vmax.f32 %v254, 0.0
    %v263 = vmax.f32 %v259, 0.0
    %v264 = vld [vmem:[#allocation8] sm:$0xff]
    %v265 = vld [vmem:[#allocation8 + $0x8] sm:$0xff]
    %v266 = vld [vmem:[#allocation8 + $0x10] sm:$0xff]
    %v267 = vld [vmem:[#allocation8 + $0x18] sm:$0xff]
    %v268 = vld [vmem:[#allocation8 + $0x20] sm:$0xff]
    %v269 = vld [vmem:[#allocation8 + $0x28] sm:$0xff]
    %v270 = vld [vmem:[#allocation8 + $0x30] sm:$0xff]
    %v271 = vld [vmem:[#allocation8 + $0x38] sm:$0xff]
    %v272 = vld [vmem:[#allocation8 + $0x40] sm:$0xff]
    %v273 = vld [vmem:[#allocation8 + $0x48] sm:$0xff]
    %v274 = vld [vmem:[#allocation8 + $0x50] sm:$0xff]
    %v275 = vld [vmem:[#allocation8 + $0x58] sm:$0xff]
    %v276 = vld [vmem:[#allocation8 + $0x60] sm:$0xf]
    %vm277 = vcmask 818176
    %v279 = vsel %vm277, %v262, 0
    %v282 = vsel %vm277, %v263, 0
    %vm284 = vcmask 1043456
    %v286 = vsel %vm284, %v276, 0
    %288 = vmatprep.subr.mxu0 0.0
    %289 = vmatpush1.msra.mxu0 %v264
    %290 = vmatprep.subr.mxu0 0.0
    %291 = vmatpush1.msra.mxu0 %v265
    %292 = vmatprep.subr.mxu0 0.0
    %293 = vmatpush1.msra.mxu0 %v266
    %294 = vmatprep.subr.mxu0 0.0
    %295 = vmatpush1.msra.mxu0 %v267
    %296 = vmatprep.subr.mxu0 0.0
    %297 = vmatpush1.msra.mxu0 %v268
    %298 = vmatprep.subr.mxu0 0.0
    %299 = vmatpush1.msra.mxu0 %v269
    %300 = vmatprep.subr.mxu0 0.0
    %301 = vmatpush1.msra.mxu0 %v270
    %302 = vmatprep.subr.mxu0 0.0
    %303 = vmatpush1.msra.mxu0 %v271
    %304 = vmatprep.subr.mxu0 0.0
    %305 = vmatpush1.msra.mxu0 %v272
    %306 = vmatprep.subr.mxu0 0.0
    %307 = vmatpush1.msra.mxu0 %v273
    %308 = vmatprep.subr.mxu0 0.0
    %309 = vmatpush1.msra.mxu0 %v274
    %310 = vmatprep.subr.mxu0 0.0
    %311 = vmatpush1.msra.mxu0 %v275
    %312 = vmatprep.subr.mxu0 0.0
    %313 = vmatpush1.msra.mxu0 %v286
    %314 = vmatprep.subr.mxu0 0.0
    %315 = vmatpush1.msra.mxu0 0.0
    %316 = vmatprep.subr.mxu0 0.0
    %317 = vmatpush1.msra.mxu0 0.0
    %318 = vmatprep.subr.mxu0 0.0
    %319 = vmatpush1.msra.mxu0 0.0
    %320 = vmatprep.subr.mxu0 0.0
    %321 = vmatpush1.msra.mxu0 0.0
    %322 = vmatprep.subr.mxu0 0.0
    %323 = vmatpush1.msra.mxu0 0.0
    %324 = vmatprep.subr.mxu0 0.0
    %325 = vmatpush1.msra.mxu0 0.0
    %326 = vmatprep.subr.mxu0 0.0
    %327 = vmatpush1.msra.mxu0 0.0
    %328 = vmatprep.subr.mxu0 0.0
    %329 = vmatpush1.msra.mxu0 0.0
    %330 = vmatprep.subr.mxu0 0.0
    %331 = vmatpush1.msra.mxu0 0.0
    %332 = vmatprep.subr.mxu0 0.0
    %333 = vmatpush1.msra.mxu0 0.0
    %334 = vmatprep.subr.mxu0 0.0
    %335 = vmatpush1.msra.mxu0 0.0
    %336 = vmatprep.subr.mxu0 0.0
    %337 = vmatpush1.msra.mxu0 0.0
    %338 = vmatprep.subr.mxu0 0.0
    %339 = vmatpush1.msra.mxu0 0.0
    %340 = vmatprep.subr.mxu0 0.0
    %341 = vmatpush1.msra.mxu0 0.0
    %342 = vmatprep.subr.mxu0 0.0
    %343 = vmatpush1.msra.mxu0 0.0
    %344 = vmatprep.subr.mxu0 0.0
    %345 = vmatpush1.msra.mxu0 0.0
    %346 = vmatprep.subr.mxu0 0.0
    %347 = vmatpush1.msra.mxu0 0.0
    %348 = vmatprep.subr.mxu0 0.0
    %349 = vmatpush1.msra.mxu0 0.0
    %350 = vmatprep.subr.mxu0 0.0
    %351 = vmatpush1.msra.mxu0 0.0
    %352 = vmatprep.mubr.f32.mxu0 0.0
    %353 = vmatmul.mubr.f32.gmra.mrb[0].mxu0 %v279
    %v354 = vpop.f32.mrb[0].mxu0
    %v355 = vadd.f32 0.0, %v354
    %v356 = vpop.f32.mrb[0].mxu0
    %357 = vmatprep.mubr.f32.mxu0 0.0
    %358 = vmatmul.mubr.f32.gmra.mrb[0].mxu0 %v282
    %v359 = vpop.f32.mrb[0].mxu0
    %v360 = vadd.f32 0.0, %v359
    %v361 = vpop.f32.mrb[0].mxu0
    %362 = vdwg.mxu0
    %v363 = vld [vmem:[%s5] sm:$0x1]
    %v365 = vlaneseq
    %v366 = vshrl.u32 %v365, 7
    %v367 = vsub.s32 0, %v366
    %v368 = vrot.slane %v363, %v367
    %370 = vmatprep.subr.mxu0 0.0
    %371 = vmatpush1.msra.mxu0 %v355
    %372 = vmatprep.subr.mxu0 0.0
    %373 = vmatpush1.msra.mxu0 %v360
    %374 = vmatprep.subr.mxu0 0.0
    %375 = vmatpush1.msra.mxu0 0.0
    %376 = vmatprep.subr.mxu0 0.0
    %377 = vmatpush1.msra.mxu0 0.0
    %378 = vmatprep.subr.mxu0 0.0
    %379 = vmatpush1.msra.mxu0 0.0
    %380 = vmatprep.subr.mxu0 0.0
    %381 = vmatpush1.msra.mxu0 0.0
    %382 = vmatprep.subr.mxu0 0.0
    %383 = vmatpush1.msra.mxu0 0.0
    %384 = vmatprep.subr.mxu0 0.0
    %385 = vmatpush1.msra.mxu0 0.0
    %386 = vmatprep.subr.mxu0 0.0
    %387 = vmatpush1.msra.mxu0 0.0
    %388 = vmatprep.subr.mxu0 0.0
    %389 = vmatpush1.msra.mxu0 0.0
    %390 = vmatprep.subr.mxu0 0.0
    %391 = vmatpush1.msra.mxu0 0.0
    %392 = vmatprep.subr.mxu0 0.0
    %393 = vmatpush1.msra.mxu0 0.0
    %394 = vmatprep.subr.mxu0 0.0
    %395 = vmatpush1.msra.mxu0 0.0
    %396 = vmatprep.subr.mxu0 0.0
    %397 = vmatpush1.msra.mxu0 0.0
    %398 = vmatprep.subr.mxu0 0.0
    %399 = vmatpush1.msra.mxu0 0.0
    %400 = vmatprep.subr.mxu0 0.0
    %401 = vmatpush1.msra.mxu0 0.0
    %402 = vmatprep.subr.mxu0 0.0
    %403 = vmatpush1.msra.mxu0 0.0
    %404 = vmatprep.subr.mxu0 0.0
    %405 = vmatpush1.msra.mxu0 0.0
    %406 = vmatprep.subr.mxu0 0.0
    %407 = vmatpush1.msra.mxu0 0.0
    %408 = vmatprep.subr.mxu0 0.0
    %409 = vmatpush1.msra.mxu0 0.0
    %410 = vmatprep.subr.mxu0 0.0
    %411 = vmatpush1.msra.mxu0 0.0
    %412 = vmatprep.subr.mxu0 0.0
    %413 = vmatpush1.msra.mxu0 0.0
    %414 = vmatprep.subr.mxu0 0.0
    %415 = vmatpush1.msra.mxu0 0.0
    %416 = vmatprep.subr.mxu0 0.0
    %417 = vmatpush1.msra.mxu0 0.0
    %418 = vmatprep.subr.mxu0 0.0
    %419 = vmatpush1.msra.mxu0 0.0
    %420 = vmatprep.subr.mxu0 0.0
    %421 = vmatpush1.msra.mxu0 0.0
    %422 = vmatprep.subr.mxu0 0.0
    %423 = vmatpush1.msra.mxu0 0.0
    %424 = vmatprep.subr.mxu0 0.0
    %425 = vmatpush1.msra.mxu0 0.0
    %426 = vmatprep.subr.mxu0 0.0
    %427 = vmatpush1.msra.mxu0 0.0
    %428 = vmatprep.subr.mxu0 0.0
    %429 = vmatpush1.msra.mxu0 0.0
    %430 = vmatprep.subr.mxu0 0.0
    %431 = vmatpush1.msra.mxu0 0.0
    %432 = vmatprep.subr.mxu0 0.0
    %433 = vmatpush1.msra.mxu0 0.0
    %434 = vmatprep.mubr.f32.mxu0 0.0
    %435 = vmatmul.mubr.f32.gmra.mrb[0].mxu0 %v182
    %v436 = vpop.f32.mrb[0].mxu0
    %v437 = vadd.f32 %v368, %v436
    %v438 = vpop.f32.mrb[0].mxu0
    %439 = vmatprep.mubr.f32.mxu0 0.0
    %440 = vmatmul.mubr.f32.gmra.mrb[0].mxu0 %v185
    %v441 = vpop.f32.mrb[0].mxu0
    %v442 = vadd.f32 %v368, %v441
    %v443 = vpop.f32.mrb[0].mxu0
    %444 = vdwg.mxu0
    %445 = vst [vmem:[#allocation10] sm:$0xff] %v437
    %446 = vst [vmem:[#allocation10 + $0x8] sm:$0xff] %v442
    // Predicated region
    $region42: #{tpu_custom_call.1} parent=1 // pred_check
      _
    $region43: #{tpu_custom_call.1} parent=1 // pred_check_branch
      %448 = sbr.rel (0) target = $region45
    $region44: #{tpu_custom_call.1} parent=1 // pred_region
      %s450 = ssub.s32 256, 256
      %451 = vsyncadd [#allocation4], %s450
      %s452 = sshll.u32 [#allocation10], 4
      %s453 = int_to_ptr.vmem [resolvable:$true] %s452
      %458 = dma.vmem_to_hbm [thread:$0]  %s453, 256, %s6, [#allocation4], 128, 128, 8
    $region45: #{tpu_custom_call.1} parent=1 // pred_fallthru
      _
    // Predicated region
    $region46: #{tpu_custom_call.1} parent=1 // pred_check
      _
    $region47: #{tpu_custom_call.1} parent=1 // pred_check_branch
      %460 = sbr.rel (0) target = $region49
    $region48: #{tpu_custom_call.1} parent=1 // pred_region
      %461 = dma.done [#allocation4], 256
    $region49: #{tpu_custom_call.1} parent=1 // pred_fallthru
      _
    %462 = vsyncpa [#allocation3], 1
    %463 = vsyncpa [#allocation6], 1
    %464 = vsyncpa [#allocation9], 1
    %465 = vsyncpa [#allocation4], 1

</llo_original>
